<compile_context>
chip_gen: v5e
topology: v5e:2x2
jax: 0.10.0
libtpu: 0.0.40
codegen_flags: <defaults>
</compile_context>

<pallas_src>
import functools

import jax
import jax.numpy as jnp
from jax.experimental import pallas as pl
from jax.experimental.pallas import tpu as pltpu

HIDDEN = 64
N_GAINS = 4


def _round_up(x, m):
    return ((x + m - 1) // m) * m


def _pid_net_kernel(xT_ref, w1_ref, b1_ref, w2_ref, b2_ref, w3_ref, b3_ref,
                    out_ref, *, act_dtype):
    """One batch tile, feature-major.

    xT_ref : (D, T)   f32   input transposed (batch on lanes)
    w1_ref : (64, D)  f32   fc1 weight (PyTorch (out, in) layout used directly)
    b1_ref : (64, 1)  f32
    w2_ref : (64, 64) mm dtype (bf16 everywhere; f32 for the exactness check)
    b2_ref : (64, 1)  f32
    w3_ref : (4, 64)  mm dtype
    b3_ref : (4, 1)   f32
    out_ref: (1, T)   f32   lane-dense output slab
    """
    f32 = jnp.float32
    mm_dtype = w2_ref.dtype

    xT = xT_ref[...]                                    # (D, T) f32
    w1 = w1_ref[...]                                    # (64, D) f32
    d = w1.shape[1]

    # ---- fc1 : unrolled VPU FMAs (K = D is tiny; skip the MXU) ----
    z1 = w1[:, 0:1] * xT[0:1, :]                        # (64, T)
    for k in range(1, d):
        z1 = z1 + w1[:, k:k + 1] * xT[k:k + 1, :]
    z1 = z1 + b1_ref[...]                               # (64, T) f32
    h1 = jnp.tanh(z1.astype(act_dtype))                 # bf16 EUP on v6e/v7x

    # ---- fc2 on the MXU (bf16 operands, f32 accumulation) ----
    z2 = jnp.dot(w2_ref[...], h1.astype(mm_dtype),
                 preferred_element_type=f32) + b2_ref[...]     # (64, T) f32
    h2 = jnp.tanh(z2.astype(act_dtype))                 # (64, T)

    # ---- fc3 on the MXU; stable softplus kept in f32 (only 4 rows) ----
    z3 = jnp.dot(w3_ref[...], h2.astype(mm_dtype),
                 preferred_element_type=f32) + b3_ref[...]     # (4, T) f32
    gains = jnp.log1p(jnp.exp(-jnp.abs(z3))) + jnp.maximum(z3, 0.0)

    # ---- weighted sum of the first 4 state rows: 4 lane-aligned FMAs ----
    out = gains[0:1, :] * xT[0:1, :]
    for j in range(1, N_GAINS):
        out = out + gains[j:j + 1, :] * xT[j:j + 1, :]
    out_ref[...] = out                                  # (1, T) lane-dense


@functools.partial(
    jax.jit, static_argnames=("tile_b", "b_pad", "act_dtype", "mm_dtype"))
def _pid_net_forward_impl(x, params, *, tile_b, b_pad, act_dtype, mm_dtype):
    w1, b1, w2, b2, w3, b3 = params
    B, D = x.shape

    # Single fused pad + transpose -> feature-major (D, b_pad), batch on lanes.
    xT = x.astype(jnp.float32).T
    if b_pad != B:
        xT = jnp.pad(xT, ((0, 0), (0, b_pad - B)))

    # MXU operands in bf16 (f32 accumulation); fc1 weight stays f32 (VPU path).
    w2m = w2.astype(mm_dtype)
    w3m = w3.astype(mm_dtype)

    grid = (b_pad // tile_b,)

    flops = (2 * b_pad * (D * HIDDEN + HIDDEN * HIDDEN + HIDDEN * N_GAINS)
             + b_pad * 2 * N_GAINS)
    transcendentals = b_pad * (2 * HIDDEN + N_GAINS)
    itemsize = jnp.dtype(mm_dtype).itemsize
    param_bytes = (4 * (w1.size + b1.size + b2.size + b3.size)
                   + itemsize * (w2m.size + w3m.size))
    bytes_accessed = 4 * b_pad * (D + 1) + param_bytes

    kernel = functools.partial(_pid_net_kernel, act_dtype=act_dtype)

    out = pl.pallas_call(
        kernel,
        out_shape=jax.ShapeDtypeStruct((1, b_pad), jnp.float32),
        grid=grid,
        in_specs=[
            pl.BlockSpec((D, tile_b), lambda i: (0, i)),        # x^T tile
            pl.BlockSpec((HIDDEN, D), lambda i: (0, 0)),        # W1 (resident)
            pl.BlockSpec((HIDDEN, 1), lambda i: (0, 0)),        # b1
            pl.BlockSpec((HIDDEN, HIDDEN), lambda i: (0, 0)),   # W2
            pl.BlockSpec((HIDDEN, 1), lambda i: (0, 0)),        # b2
            pl.BlockSpec((N_GAINS, HIDDEN), lambda i: (0, 0)),  # W3
            pl.BlockSpec((N_GAINS, 1), lambda i: (0, 0)),       # b3
        ],
        out_specs=pl.BlockSpec((1, tile_b), lambda i: (0, i)),
        compiler_params=pltpu.CompilerParams(
            dimension_semantics=("parallel",)),
        cost_estimate=pl.CostEstimate(
            flops=flops,
            transcendentals=transcendentals,
            bytes_accessed=bytes_accessed),
    )(xT, w1, b1, w2m, b2, w3m, b3)

    return out[:, :B].reshape(B, 1)


def _bf16_eup_available():
    """bf16 tanh/exp on the EUP exists on v6e/v7x, not on v5e and older."""
    try:
        kind = jax.devices()[0].device_kind.lower()
    except Exception:
        return False
    return not any(old in kind for old in ("v2", "v3", "v4", "v5"))


def _resolve_tiling(B, tile_b, cap=2048):
    """Pad the batch only to a lane multiple; pick tile_b dividing it.

    Prefers >= 2 grid steps (so the "parallel" axis can feed both v7x
    TensorCores) and caps the tile at `cap` columns (VMEM is a non-issue;
    the cap just bounds per-step DMA size while amortizing step overhead).
    """
    if tile_b is not None:
        assert tile_b > 0 and tile_b % 128 == 0
        return _round_up(max(B, 1), tile_b), tile_b
    b_pad = _round_up(max(B, 1), 128)
    m = b_pad // 128
    target = max(m // 2, 1)        # >= 2 steps whenever m >= 2
    best = 1
    for t in range(1, min(cap // 128, m) + 1):
        if m % t == 0 and t <= target:
            best = t
    return b_pad, best * 128


def pid_net_forward(x, params, *, tile_b=None, act_dtype=None, mm_dtype=None):
    """x: (B, D) float32 with D >= 4.  Returns (B, 1) float32."""
    B, D = x.shape
    assert D >= N_GAINS, "PID_Net forward uses the first 4 state components"
    if act_dtype is None:
        act_dtype = jnp.bfloat16 if _bf16_eup_available() else jnp.float32
    if mm_dtype is None:
        mm_dtype = jnp.bfloat16    # MXU is bf16-native on v5e/v6e/v7x
    b_pad, tile = _resolve_tiling(B, tile_b)
    return _pid_net_forward_impl(x, params, tile_b=tile, b_pad=b_pad,
                                 act_dtype=act_dtype, mm_dtype=mm_dtype)


def init_params(key, input_layer):
    """Deterministic init matching nn.Linear; weights kept in PyTorch (out, in)
    layout (used directly in the feature-major kernel), biases as (out, 1)."""
    def linear_init(k, fan_in, fan_out):
        kw, kb = jax.random.split(k)
        bound = 1.0 / jnp.sqrt(jnp.float32(fan_in))
        w = jax.random.uniform(kw, (fan_out, fan_in), jnp.float32, -bound, bound)
        b = jax.random.uniform(kb, (fan_out, 1), jnp.float32, -bound, bound)
        return w, b

    k1, k2, k3 = jax.random.split(key, 3)
    w1, b1 = linear_init(k1, input_layer, HIDDEN)
    w2, b2 = linear_init(k2, HIDDEN, HIDDEN)
    w3, b3 = linear_init(k3, HIDDEN, N_GAINS)
    return (w1, b1, w2, b2, w3, b3)


def pid_net_reference(x, params, act_dtype=jnp.float32, mm_dtype=jnp.float32):
    """Pure-JAX reference of the PyTorch forward.  With the default f32 dtypes
    this is the exact spec; with bf16 dtypes it precision-matches the kernel's
    bf16 activation / MXU path for tolerance-checking."""
    w1, b1, w2, b2, w3, b3 = params
    f32 = jnp.float32
    z1 = x.astype(f32) @ w1.T + b1.T
    h1 = jnp.tanh(z1.astype(act_dtype))
    z2 = jnp.dot(h1.astype(mm_dtype), w2.T.astype(mm_dtype),
                 preferred_element_type=f32) + b2.T
    h2 = jnp.tanh(z2.astype(act_dtype))
    z3 = jnp.dot(h2.astype(mm_dtype), w3.T.astype(mm_dtype),
                 preferred_element_type=f32) + b3.T
    g = jax.nn.softplus(z3)
    return jnp.sum(g * x[:, :N_GAINS], axis=1, keepdims=True)


if __name__ == "__main__":
    key = jax.random.PRNGKey(0)
    k_params, k_x1, k_x2 = jax.random.split(key, 3)

    input_layer = 4   # forward() consumes exactly state[:, 0:4]
    params = init_params(k_params, input_layer)

    # --- Exact-semantics check: full-f32 kernel path vs f32 reference. ---
    x_small = jax.random.normal(k_x1, (2, input_layer), jnp.float32)
    out_f32 = jax.block_until_ready(
        pid_net_forward(x_small, params,
                        act_dtype=jnp.float32, mm_dtype=jnp.float32))
    ref_f32 = pid_net_reference(x_small, params)
    assert out_f32.shape == (2, 1), out_f32.shape
    assert jnp.allclose(out_f32, ref_f32, atol=1e-5, rtol=1e-5)

    # --- Default (device-tuned; bf16 tanh/MXU on v6e/v7x, f32 EUP on v5e)
    #     path over a multi-tile, padded batch, checked against a
    #     precision-matched reference. ---
    act_dt = jnp.bfloat16 if _bf16_eup_available() else jnp.float32
    x_big = jax.random.normal(k_x2, (300, input_layer), jnp.float32)
    out_big = jax.block_until_ready(
        pid_net_forward(x_big, params, tile_b=128))      # 3 grid steps + pad
    ref_big = pid_net_reference(x_big, params,
                                act_dtype=act_dt, mm_dtype=jnp.bfloat16)
    assert out_big.shape == (300, 1), out_big.shape
    assert jnp.allclose(out_big, ref_big, atol=5e-2, rtol=5e-2)

    print("KERNEL_OK")
</pallas_src>

<mosaic_0001>
module attributes {stable_mosaic.version = 11 : i64} {
  func.func @_pid_net_kernel(%arg0: i32, %arg1: memref<4x128xf32, #tpu.memory_space<vmem>>, %arg2: memref<64x4xf32, #tpu.memory_space<vmem>>, %arg3: memref<64x1xf32, #tpu.memory_space<vmem>>, %arg4: memref<64x64xf32, #tpu.memory_space<vmem>>, %arg5: memref<64x1xf32, #tpu.memory_space<vmem>>, %arg6: memref<4x64xf32, #tpu.memory_space<vmem>>, %arg7: memref<4x1xf32, #tpu.memory_space<vmem>>, %arg8: memref<1x128xf32, #tpu.memory_space<vmem>>) attributes {dimension_semantics = [#tpu.dimension_semantics<parallel>], iteration_bounds = array<i64: 1>, scalar_prefetch = 0 : i64, scratch_operands = 0 : i64, tpu.core_type = #tpu.core_type<tc>, window_params = [{transform_indices = @transform_0, window_bounds = array<i64: 4, 128>}, {pipeline_mode = #tpu.pipeline_mode<synchronous>, transform_indices = @transform_1, window_bounds = array<i64: 64, 4>}, {pipeline_mode = #tpu.pipeline_mode<synchronous>, transform_indices = @transform_2, window_bounds = array<i64: 64, 1>}, {pipeline_mode = #tpu.pipeline_mode<synchronous>, transform_indices = @transform_3, window_bounds = array<i64: 64, 64>}, {pipeline_mode = #tpu.pipeline_mode<synchronous>, transform_indices = @transform_4, window_bounds = array<i64: 64, 1>}, {pipeline_mode = #tpu.pipeline_mode<synchronous>, transform_indices = @transform_5, window_bounds = array<i64: 4, 64>}, {pipeline_mode = #tpu.pipeline_mode<synchronous>, transform_indices = @transform_6, window_bounds = array<i64: 4, 1>}, {transform_indices = @transform_7, window_bounds = array<i64: 1, 128>}]} {
    %c0 = arith.constant 0 : index
    %c0_0 = arith.constant 0 : index
    %0 = vector.load %arg1[%c0, %c0_0] : memref<4x128xf32, #tpu.memory_space<vmem>>, vector<4x128xf32>
    %c0_1 = arith.constant 0 : index
    %c0_2 = arith.constant 0 : index
    %1 = vector.load %arg2[%c0_1, %c0_2] : memref<64x4xf32, #tpu.memory_space<vmem>>, vector<64x4xf32>
    %2 = vector.extract_strided_slice %1 {offsets = [0, 0], sizes = [64, 1], strides = [1, 1]} : vector<64x4xf32> to vector<64x1xf32>
    %3 = vector.extract_strided_slice %0 {offsets = [0, 0], sizes = [1, 128], strides = [1, 1]} : vector<4x128xf32> to vector<1x128xf32>
    %4 = vector.broadcast %2 : vector<64x1xf32> to vector<64x128xf32>
    %5 = vector.broadcast %3 : vector<1x128xf32> to vector<64x128xf32>
    %6 = arith.mulf %4, %5 : vector<64x128xf32>
    %7 = vector.extract_strided_slice %1 {offsets = [0, 1], sizes = [64, 1], strides = [1, 1]} : vector<64x4xf32> to vector<64x1xf32>
    %8 = vector.extract_strided_slice %0 {offsets = [1, 0], sizes = [1, 128], strides = [1, 1]} : vector<4x128xf32> to vector<1x128xf32>
    %9 = vector.broadcast %7 : vector<64x1xf32> to vector<64x128xf32>
    %10 = vector.broadcast %8 : vector<1x128xf32> to vector<64x128xf32>
    %11 = arith.mulf %9, %10 : vector<64x128xf32>
    %12 = arith.addf %6, %11 : vector<64x128xf32>
    %13 = vector.extract_strided_slice %1 {offsets = [0, 2], sizes = [64, 1], strides = [1, 1]} : vector<64x4xf32> to vector<64x1xf32>
    %14 = vector.extract_strided_slice %0 {offsets = [2, 0], sizes = [1, 128], strides = [1, 1]} : vector<4x128xf32> to vector<1x128xf32>
    %15 = vector.broadcast %13 : vector<64x1xf32> to vector<64x128xf32>
    %16 = vector.broadcast %14 : vector<1x128xf32> to vector<64x128xf32>
    %17 = arith.mulf %15, %16 : vector<64x128xf32>
    %18 = arith.addf %12, %17 : vector<64x128xf32>
    %19 = vector.extract_strided_slice %1 {offsets = [0, 3], sizes = [64, 1], strides = [1, 1]} : vector<64x4xf32> to vector<64x1xf32>
    %20 = vector.extract_strided_slice %0 {offsets = [3, 0], sizes = [1, 128], strides = [1, 1]} : vector<4x128xf32> to vector<1x128xf32>
    %21 = vector.broadcast %19 : vector<64x1xf32> to vector<64x128xf32>
    %22 = vector.broadcast %20 : vector<1x128xf32> to vector<64x128xf32>
    %23 = arith.mulf %21, %22 : vector<64x128xf32>
    %24 = arith.addf %18, %23 : vector<64x128xf32>
    %c0_3 = arith.constant 0 : index
    %c0_4 = arith.constant 0 : index
    %25 = vector.load %arg3[%c0_3, %c0_4] : memref<64x1xf32, #tpu.memory_space<vmem>>, vector<64x1xf32>
    %26 = vector.broadcast %25 : vector<64x1xf32> to vector<64x128xf32>
    %27 = arith.addf %24, %26 : vector<64x128xf32>
    %28 = math.tanh %27 : vector<64x128xf32>
    %c0_5 = arith.constant 0 : index
    %c0_6 = arith.constant 0 : index
    %29 = vector.load %arg4[%c0_5, %c0_6] : memref<64x64xf32, #tpu.memory_space<vmem>>, vector<64x64xf32>
    %cst = arith.constant dense<0.000000e+00> : vector<64x128xf32>
    %30 = tpu.matmul %29, %28, %cst {dimension_numbers = #tpu.dot_dimension_numbers<[1], [0], [0], [1], [0, 0, 1, 1], [], []>} : vector<64x64xf32>, vector<64x128xf32>, vector<64x128xf32> -> vector<64x128xf32>
    %c0_7 = arith.constant 0 : index
    %c0_8 = arith.constant 0 : index
    %31 = vector.load %arg5[%c0_7, %c0_8] : memref<64x1xf32, #tpu.memory_space<vmem>>, vector<64x1xf32>
    %32 = vector.broadcast %31 : vector<64x1xf32> to vector<64x128xf32>
    %33 = arith.addf %30, %32 : vector<64x128xf32>
    %34 = math.tanh %33 : vector<64x128xf32>
    %c0_9 = arith.constant 0 : index
    %c0_10 = arith.constant 0 : index
    %35 = vector.load %arg6[%c0_9, %c0_10] : memref<4x64xf32, #tpu.memory_space<vmem>>, vector<4x64xf32>
    %cst_11 = arith.constant dense<0.000000e+00> : vector<4x128xf32>
    %36 = tpu.matmul %35, %34, %cst_11 {dimension_numbers = #tpu.dot_dimension_numbers<[1], [0], [0], [1], [0, 0, 1, 1], [], []>} : vector<4x64xf32>, vector<64x128xf32>, vector<4x128xf32> -> vector<4x128xf32>
    %c0_12 = arith.constant 0 : index
    %c0_13 = arith.constant 0 : index
    %37 = vector.load %arg7[%c0_12, %c0_13] : memref<4x1xf32, #tpu.memory_space<vmem>>, vector<4x1xf32>
    %38 = vector.broadcast %37 : vector<4x1xf32> to vector<4x128xf32>
    %39 = arith.addf %36, %38 : vector<4x128xf32>
    %40 = math.absf %39 : vector<4x128xf32>
    %cst_14 = arith.constant 0.000000e+00 : f32
    %41 = vector.broadcast %cst_14 : f32 to vector<4x128xf32>
    %42 = arith.subf %41, %40 : vector<4x128xf32>
    %43 = math.exp %42 : vector<4x128xf32>
    %44 = math.log1p %43 : vector<4x128xf32>
    %cst_15 = arith.constant 0.000000e+00 : f32
    %45 = vector.broadcast %cst_15 : f32 to vector<4x128xf32>
    %46 = arith.maximumf %39, %45 : vector<4x128xf32>
    %47 = arith.addf %44, %46 : vector<4x128xf32>
    %48 = vector.extract_strided_slice %47 {offsets = [0, 0], sizes = [1, 128], strides = [1, 1]} : vector<4x128xf32> to vector<1x128xf32>
    %49 = vector.extract_strided_slice %0 {offsets = [0, 0], sizes = [1, 128], strides = [1, 1]} : vector<4x128xf32> to vector<1x128xf32>
    %50 = arith.mulf %48, %49 : vector<1x128xf32>
    %51 = vector.extract_strided_slice %47 {offsets = [1, 0], sizes = [1, 128], strides = [1, 1]} : vector<4x128xf32> to vector<1x128xf32>
    %52 = vector.extract_strided_slice %0 {offsets = [1, 0], sizes = [1, 128], strides = [1, 1]} : vector<4x128xf32> to vector<1x128xf32>
    %53 = arith.mulf %51, %52 : vector<1x128xf32>
    %54 = arith.addf %50, %53 : vector<1x128xf32>
    %55 = vector.extract_strided_slice %47 {offsets = [2, 0], sizes = [1, 128], strides = [1, 1]} : vector<4x128xf32> to vector<1x128xf32>
    %56 = vector.extract_strided_slice %0 {offsets = [2, 0], sizes = [1, 128], strides = [1, 1]} : vector<4x128xf32> to vector<1x128xf32>
    %57 = arith.mulf %55, %56 : vector<1x128xf32>
    %58 = arith.addf %54, %57 : vector<1x128xf32>
    %59 = vector.extract_strided_slice %47 {offsets = [3, 0], sizes = [1, 128], strides = [1, 1]} : vector<4x128xf32> to vector<1x128xf32>
    %60 = vector.extract_strided_slice %0 {offsets = [3, 0], sizes = [1, 128], strides = [1, 1]} : vector<4x128xf32> to vector<1x128xf32>
    %61 = arith.mulf %59, %60 : vector<1x128xf32>
    %62 = arith.addf %58, %61 : vector<1x128xf32>
    %c0_16 = arith.constant 0 : index
    %c0_17 = arith.constant 0 : index
    %63 = vector.load %arg8[%c0_16, %c0_17] : memref<1x128xf32, #tpu.memory_space<vmem>>, vector<1x128xf32>
    tpu.vector_store %arg8[%c0_16, %c0_17], %62 {strides = array<i32>} : memref<1x128xf32, #tpu.memory_space<vmem>>, vector<1x128xf32>,
    return
  }
  func.func @transform_0(%arg0: i32) -> (i32, i32) {
    %c0_i32 = arith.constant 0 : i32
    %c0_i32_0 = arith.constant 0 : i32
    return %c0_i32, %arg0 : i32, i32
  }
  func.func @transform_1(%arg0: i32) -> (i32, i32) {
    %c0_i32 = arith.constant 0 : i32
    %c0_i32_0 = arith.constant 0 : i32
    %c0_i32_1 = arith.constant 0 : i32
    return %c0_i32, %c0_i32_0 : i32, i32
  }
  func.func @transform_2(%arg0: i32) -> (i32, i32) {
    %c0_i32 = arith.constant 0 : i32
    %c0_i32_0 = arith.constant 0 : i32
    %c0_i32_1 = arith.constant 0 : i32
    return %c0_i32, %c0_i32_0 : i32, i32
  }
  func.func @transform_3(%arg0: i32) -> (i32, i32) {
    %c0_i32 = arith.constant 0 : i32
    %c0_i32_0 = arith.constant 0 : i32
    %c0_i32_1 = arith.constant 0 : i32
    return %c0_i32, %c0_i32_0 : i32, i32
  }
  func.func @transform_4(%arg0: i32) -> (i32, i32) {
    %c0_i32 = arith.constant 0 : i32
    %c0_i32_0 = arith.constant 0 : i32
    %c0_i32_1 = arith.constant 0 : i32
    return %c0_i32, %c0_i32_0 : i32, i32
  }
  func.func @transform_5(%arg0: i32) -> (i32, i32) {
    %c0_i32 = arith.constant 0 : i32
    %c0_i32_0 = arith.constant 0 : i32
    %c0_i32_1 = arith.constant 0 : i32
    return %c0_i32, %c0_i32_0 : i32, i32
  }
  func.func @transform_6(%arg0: i32) -> (i32, i32) {
    %c0_i32 = arith.constant 0 : i32
    %c0_i32_0 = arith.constant 0 : i32
    %c0_i32_1 = arith.constant 0 : i32
    return %c0_i32, %c0_i32_0 : i32, i32
  }
  func.func @transform_7(%arg0: i32) -> (i32, i32) {
    %c0_i32 = arith.constant 0 : i32
    %c0_i32_0 = arith.constant 0 : i32
    return %c0_i32, %arg0 : i32, i32
  }
}

</mosaic_0001>

<llo_original>
// kernel: _pid_net_forward_impl.1
$region0: #{_pid_net_forward_impl.1}
  #allocation0 [shape = 'u32[]', space=smem, size = 0x4, offset = 0x4, fixed_abs, tag = 'smem constant byte address 0x4 - core index']
  #allocation1 [shape = 'u32[72,128]{1,0:T(1,128)}', space=vmem, size = 0x9000, scoped, tag = 'internal scratch']
  %s0 = inlined_call_operand.vmem [shape: f32[4,128], index: 0, kind: input, shape index: {}]
  %s1 = inlined_call_operand.vmem [shape: f32[64,4], index: 1, kind: input, shape index: {}]
  %s2 = inlined_call_operand.vmem [shape: f32[64,1], index: 2, kind: input, shape index: {}]
  %s3 = inlined_call_operand.vmem [shape: f32[64,64], index: 3, kind: input, shape index: {}]
  %s4 = inlined_call_operand.vmem [shape: f32[64,1], index: 4, kind: input, shape index: {}]
  %s5 = inlined_call_operand.vmem [shape: f32[4,64], index: 5, kind: input, shape index: {}]
  %s6 = inlined_call_operand.vmem [shape: f32[4,1], index: 6, kind: input, shape index: {}]
  %s7 = inlined_call_operand.vmem [shape: f32[1,128], index: 7, kind: output, shape index: {}]
  %s8 = sld [smem:[#allocation0]]
  $region38: #{_pid_net_forward_impl.1} parent=0
    _
  %s10 = ssub.s32 1, %s8
  %s11 = scalar_select 0, %s10, %s8
  // Predicated region
  $region2: #{_pid_net_forward_impl.1} parent=0 // pred_check
    _
  $region3: #{_pid_net_forward_impl.1} parent=0 // pred_check_branch
    %13 = sbr.rel (0) target = $region5
  $region4: #{_pid_net_forward_impl.1} parent=0 // pred_region
    _
  $region5: #{_pid_net_forward_impl.1} parent=0 // pred_fallthru
    _
  // Predicated region
  $region6: #{_pid_net_forward_impl.1} parent=0 // pred_check
    _
  $region7: #{_pid_net_forward_impl.1} parent=0 // pred_check_branch
    %15 = sbr.rel (0) target = $region9
  $region8: #{_pid_net_forward_impl.1} parent=0 // pred_region
    _
  $region9: #{_pid_net_forward_impl.1} parent=0 // pred_fallthru
    _
  // Predicated region
  $region10: #{_pid_net_forward_impl.1} parent=0 // pred_check
    _
  $region11: #{_pid_net_forward_impl.1} parent=0 // pred_check_branch
    %17 = sbr.rel (0) target = $region13
  $region12: #{_pid_net_forward_impl.1} parent=0 // pred_region
    _
  $region13: #{_pid_net_forward_impl.1} parent=0 // pred_fallthru
    _
  // Predicated region
  $region14: #{_pid_net_forward_impl.1} parent=0 // pred_check
    _
  $region15: #{_pid_net_forward_impl.1} parent=0 // pred_check_branch
    %19 = sbr.rel (0) target = $region17
  $region16: #{_pid_net_forward_impl.1} parent=0 // pred_region
    _
  $region17: #{_pid_net_forward_impl.1} parent=0 // pred_fallthru
    _
  // Predicated region
  $region18: #{_pid_net_forward_impl.1} parent=0 // pred_check
    _
  $region19: #{_pid_net_forward_impl.1} parent=0 // pred_check_branch
    %21 = sbr.rel (0) target = $region21
  $region20: #{_pid_net_forward_impl.1} parent=0 // pred_region
    _
  $region21: #{_pid_net_forward_impl.1} parent=0 // pred_fallthru
    _
  // Predicated region
  $region22: #{_pid_net_forward_impl.1} parent=0 // pred_check
    _
  $region23: #{_pid_net_forward_impl.1} parent=0 // pred_check_branch
    %23 = sbr.rel (0) target = $region25
  $region24: #{_pid_net_forward_impl.1} parent=0 // pred_region
    _
  $region25: #{_pid_net_forward_impl.1} parent=0 // pred_fallthru
    _
  // Predicated region
  $region26: #{_pid_net_forward_impl.1} parent=0 // pred_check
    _
  $region27: #{_pid_net_forward_impl.1} parent=0 // pred_check_branch
    %25 = sbr.rel (0) target = $region29
  $region28: #{_pid_net_forward_impl.1} parent=0 // pred_region
    _
  $region29: #{_pid_net_forward_impl.1} parent=0 // pred_fallthru
    _
  %v26 = vld [vmem:[%s0] sm:$0xf]
  %v27 = vld [vmem:[%s1] sm:$0xff]
  %v28 = vld [vmem:[%s1 + $0x8] sm:$0xff]
  %v29 = vld [vmem:[%s1 + $0x10] sm:$0xff]
  %v30 = vld [vmem:[%s1 + $0x18] sm:$0xff]
  %v31 = vld [vmem:[%s1 + $0x20] sm:$0xff]
  %v32 = vld [vmem:[%s1 + $0x28] sm:$0xff]
  %v33 = vld [vmem:[%s1 + $0x30] sm:$0xff]
  %v34 = vld [vmem:[%s1 + $0x38] sm:$0xff]
  %36 = vset.pattern.permute.xlu0 0
  %37 = vperm.xlu0 %36, %v27
  %v38 = vpop.permute.xlu0 %37
  %41 = vset.pattern.permute.xlu0 0
  %42 = vperm.xlu0 %41, %v28
  %v43 = vpop.permute.xlu0 %42
  %46 = vset.pattern.permute.xlu0 0
  %47 = vperm.xlu0 %46, %v29
  %v48 = vpop.permute.xlu0 %47
  %51 = vset.pattern.permute.xlu0 0
  %52 = vperm.xlu0 %51, %v30
  %v53 = vpop.permute.xlu0 %52
  %56 = vset.pattern.permute.xlu0 0
  %57 = vperm.xlu0 %56, %v31
  %v58 = vpop.permute.xlu0 %57
  %61 = vset.pattern.permute.xlu0 0
  %62 = vperm.xlu0 %61, %v32
  %v63 = vpop.permute.xlu0 %62
  %66 = vset.pattern.permute.xlu0 0
  %67 = vperm.xlu0 %66, %v33
  %v68 = vpop.permute.xlu0 %67
  %71 = vset.pattern.permute.xlu0 0
  %72 = vperm.xlu0 %71, %v34
  %v73 = vpop.permute.xlu0 %72
  %v75 = vperm.slane %v26, 0
  %v76 = vmul.f32 %v38, %v75
  %v77 = vmul.f32 %v43, %v75
  %v78 = vmul.f32 %v48, %v75
  %v79 = vmul.f32 %v53, %v75
  %v80 = vmul.f32 %v58, %v75
  %v81 = vmul.f32 %v63, %v75
  %v82 = vmul.f32 %v68, %v75
  %v83 = vmul.f32 %v73, %v75
  %84 = vset.pattern.permute.xlu0 1
  %85 = vperm.xlu0 %84, %v27
  %v86 = vpop.permute.xlu0 %85
  %88 = vset.pattern.permute.xlu0 1
  %89 = vperm.xlu0 %88, %v28
  %v90 = vpop.permute.xlu0 %89
  %92 = vset.pattern.permute.xlu0 1
  %93 = vperm.xlu0 %92, %v29
  %v94 = vpop.permute.xlu0 %93
  %96 = vset.pattern.permute.xlu0 1
  %97 = vperm.xlu0 %96, %v30
  %v98 = vpop.permute.xlu0 %97
  %100 = vset.pattern.permute.xlu0 1
  %101 = vperm.xlu0 %100, %v31
  %v102 = vpop.permute.xlu0 %101
  %104 = vset.pattern.permute.xlu0 1
  %105 = vperm.xlu0 %104, %v32
  %v106 = vpop.permute.xlu0 %105
  %108 = vset.pattern.permute.xlu0 1
  %109 = vperm.xlu0 %108, %v33
  %v110 = vpop.permute.xlu0 %109
  %112 = vset.pattern.permute.xlu0 1
  %113 = vperm.xlu0 %112, %v34
  %v114 = vpop.permute.xlu0 %113
  %v116 = vperm.slane %v26, 1
  %v117 = vmul.f32 %v86, %v116
  %v118 = vmul.f32 %v90, %v116
  %v119 = vmul.f32 %v94, %v116
  %v120 = vmul.f32 %v98, %v116
  %v121 = vmul.f32 %v102, %v116
  %v122 = vmul.f32 %v106, %v116
  %v123 = vmul.f32 %v110, %v116
  %v124 = vmul.f32 %v114, %v116
  %v125 = vadd.f32 %v76, %v117
  %v126 = vadd.f32 %v77, %v118
  %v127 = vadd.f32 %v78, %v119
  %v128 = vadd.f32 %v79, %v120
  %v129 = vadd.f32 %v80, %v121
  %v130 = vadd.f32 %v81, %v122
  %v131 = vadd.f32 %v82, %v123
  %v132 = vadd.f32 %v83, %v124
  %133 = vset.pattern.permute.xlu0 2
  %134 = vperm.xlu0 %133, %v27
  %v135 = vpop.permute.xlu0 %134
  %137 = vset.pattern.permute.xlu0 2
  %138 = vperm.xlu0 %137, %v28
  %v139 = vpop.permute.xlu0 %138
  %141 = vset.pattern.permute.xlu0 2
  %142 = vperm.xlu0 %141, %v29
  %v143 = vpop.permute.xlu0 %142
  %145 = vset.pattern.permute.xlu0 2
  %146 = vperm.xlu0 %145, %v30
  %v147 = vpop.permute.xlu0 %146
  %149 = vset.pattern.permute.xlu0 2
  %150 = vperm.xlu0 %149, %v31
  %v151 = vpop.permute.xlu0 %150
  %153 = vset.pattern.permute.xlu0 2
  %154 = vperm.xlu0 %153, %v32
  %v155 = vpop.permute.xlu0 %154
  %157 = vset.pattern.permute.xlu0 2
  %158 = vperm.xlu0 %157, %v33
  %v159 = vpop.permute.xlu0 %158
  %161 = vset.pattern.permute.xlu0 2
  %162 = vperm.xlu0 %161, %v34
  %v163 = vpop.permute.xlu0 %162
  %v165 = vperm.slane %v26, 2
  %v166 = vmul.f32 %v135, %v165
  %v167 = vmul.f32 %v139, %v165
  %v168 = vmul.f32 %v143, %v165
  %v169 = vmul.f32 %v147, %v165
  %v170 = vmul.f32 %v151, %v165
  %v171 = vmul.f32 %v155, %v165
  %v172 = vmul.f32 %v159, %v165
  %v173 = vmul.f32 %v163, %v165
  %v174 = vadd.f32 %v125, %v166
  %v175 = vadd.f32 %v126, %v167
  %v176 = vadd.f32 %v127, %v168
  %v177 = vadd.f32 %v128, %v169
  %v178 = vadd.f32 %v129, %v170
  %v179 = vadd.f32 %v130, %v171
  %v180 = vadd.f32 %v131, %v172
  %v181 = vadd.f32 %v132, %v173
  %182 = vset.pattern.permute.xlu0 3
  %183 = vperm.xlu0 %182, %v27
  %v184 = vpop.permute.xlu0 %183
  %186 = vset.pattern.permute.xlu0 3
  %187 = vperm.xlu0 %186, %v28
  %v188 = vpop.permute.xlu0 %187
  %190 = vset.pattern.permute.xlu0 3
  %191 = vperm.xlu0 %190, %v29
  %v192 = vpop.permute.xlu0 %191
  %194 = vset.pattern.permute.xlu0 3
  %195 = vperm.xlu0 %194, %v30
  %v196 = vpop.permute.xlu0 %195
  %198 = vset.pattern.permute.xlu0 3
  %199 = vperm.xlu0 %198, %v31
  %v200 = vpop.permute.xlu0 %199
  %202 = vset.pattern.permute.xlu0 3
  %203 = vperm.xlu0 %202, %v32
  %v204 = vpop.permute.xlu0 %203
  %206 = vset.pattern.permute.xlu0 3
  %207 = vperm.xlu0 %206, %v33
  %v208 = vpop.permute.xlu0 %207
  %210 = vset.pattern.permute.xlu0 3
  %211 = vperm.xlu0 %210, %v34
  %v212 = vpop.permute.xlu0 %211
  %v214 = vperm.slane %v26, 3
  %v215 = vmul.f32 %v184, %v214
  %v216 = vmul.f32 %v188, %v214
  %v217 = vmul.f32 %v192, %v214
  %v218 = vmul.f32 %v196, %v214
  %v219 = vmul.f32 %v200, %v214
  %v220 = vmul.f32 %v204, %v214
  %v221 = vmul.f32 %v208, %v214
  %v222 = vmul.f32 %v212, %v214
  %v223 = vadd.f32 %v174, %v215
  %v224 = vadd.f32 %v175, %v216
  %v225 = vadd.f32 %v176, %v217
  %v226 = vadd.f32 %v177, %v218
  %v227 = vadd.f32 %v178, %v219
  %v228 = vadd.f32 %v179, %v220
  %v229 = vadd.f32 %v180, %v221
  %v230 = vadd.f32 %v181, %v222
  %v231 = vld [vmem:[%s2] sm:$0xff]
  %v232 = vld [vmem:[%s2 + $0x8] sm:$0xff]
  %v233 = vld [vmem:[%s2 + $0x10] sm:$0xff]
  %v234 = vld [vmem:[%s2 + $0x18] sm:$0xff]
  %v235 = vld [vmem:[%s2 + $0x20] sm:$0xff]
  %v236 = vld [vmem:[%s2 + $0x28] sm:$0xff]
  %v237 = vld [vmem:[%s2 + $0x30] sm:$0xff]
  %v238 = vld [vmem:[%s2 + $0x38] sm:$0xff]
  %240 = vset.pattern.permute.xlu0 0
  %241 = vperm.xlu0 %240, %v231
  %v242 = vpop.permute.xlu0 %241
  %245 = vset.pattern.permute.xlu0 0
  %246 = vperm.xlu0 %245, %v232
  %v247 = vpop.permute.xlu0 %246
  %250 = vset.pattern.permute.xlu0 0
  %251 = vperm.xlu0 %250, %v233
  %v252 = vpop.permute.xlu0 %251
  %255 = vset.pattern.permute.xlu0 0
  %256 = vperm.xlu0 %255, %v234
  %v257 = vpop.permute.xlu0 %256
  %260 = vset.pattern.permute.xlu0 0
  %261 = vperm.xlu0 %260, %v235
  %v262 = vpop.permute.xlu0 %261
  %265 = vset.pattern.permute.xlu0 0
  %266 = vperm.xlu0 %265, %v236
  %v267 = vpop.permute.xlu0 %266
  %270 = vset.pattern.permute.xlu0 0
  %271 = vperm.xlu0 %270, %v237
  %v272 = vpop.permute.xlu0 %271
  %275 = vset.pattern.permute.xlu0 0
  %276 = vperm.xlu0 %275, %v238
  %v277 = vpop.permute.xlu0 %276
  %v279 = vadd.f32 %v223, %v242
  %v280 = vadd.f32 %v224, %v247
  %v281 = vadd.f32 %v225, %v252
  %v282 = vadd.f32 %v226, %v257
  %v283 = vadd.f32 %v227, %v262
  %v284 = vadd.f32 %v228, %v267
  %v285 = vadd.f32 %v229, %v272
  %v286 = vadd.f32 %v230, %v277
  %v287 = vtanh.pop %v279
  %v288 = vtanh.pop %v280
  %v289 = vtanh.pop %v281
  %v290 = vtanh.pop %v282
  %v291 = vtanh.pop %v283
  %v292 = vtanh.pop %v284
  %v293 = vtanh.pop %v285
  %v294 = vtanh.pop %v286
  %v295 = vld [vmem:[%s3] sm:$0xff]
  %v296 = vld [vmem:[%s3 + $0x8] sm:$0xff]
  %v297 = vld [vmem:[%s3 + $0x10] sm:$0xff]
  %v298 = vld [vmem:[%s3 + $0x18] sm:$0xff]
  %v299 = vld [vmem:[%s3 + $0x20] sm:$0xff]
  %v300 = vld [vmem:[%s3 + $0x28] sm:$0xff]
  %v301 = vld [vmem:[%s3 + $0x30] sm:$0xff]
  %v302 = vld [vmem:[%s3 + $0x38] sm:$0xff]
  %v303 = vld [vmem:[%s4] sm:$0xff]
  %v304 = vld [vmem:[%s4 + $0x8] sm:$0xff]
  %v305 = vld [vmem:[%s4 + $0x10] sm:$0xff]
  %v306 = vld [vmem:[%s4 + $0x18] sm:$0xff]
  %v307 = vld [vmem:[%s4 + $0x20] sm:$0xff]
  %v308 = vld [vmem:[%s4 + $0x28] sm:$0xff]
  %v309 = vld [vmem:[%s4 + $0x30] sm:$0xff]
  %v310 = vld [vmem:[%s4 + $0x38] sm:$0xff]
  %312 = vset.pattern.permute.xlu0 0
  %313 = vperm.xlu0 %312, %v303
  %v314 = vpop.permute.xlu0 %313
  %317 = vset.pattern.permute.xlu0 0
  %318 = vperm.xlu0 %317, %v304
  %v319 = vpop.permute.xlu0 %318
  %322 = vset.pattern.permute.xlu0 0
  %323 = vperm.xlu0 %322, %v305
  %v324 = vpop.permute.xlu0 %323
  %327 = vset.pattern.permute.xlu0 0
  %328 = vperm.xlu0 %327, %v306
  %v329 = vpop.permute.xlu0 %328
  %332 = vset.pattern.permute.xlu0 0
  %333 = vperm.xlu0 %332, %v307
  %v334 = vpop.permute.xlu0 %333
  %337 = vset.pattern.permute.xlu0 0
  %338 = vperm.xlu0 %337, %v308
  %v339 = vpop.permute.xlu0 %338
  %342 = vset.pattern.permute.xlu0 0
  %343 = vperm.xlu0 %342, %v309
  %v344 = vpop.permute.xlu0 %343
  %347 = vset.pattern.permute.xlu0 0
  %348 = vperm.xlu0 %347, %v310
  %v349 = vpop.permute.xlu0 %348
  %vm351 = vcmask 523264
  %v353 = vsel %vm351, %v295, 0
  %v356 = vsel %vm351, %v296, 0
  %v359 = vsel %vm351, %v297, 0
  %v362 = vsel %vm351, %v298, 0
  %v365 = vsel %vm351, %v299, 0
  %v368 = vsel %vm351, %v300, 0
  %v371 = vsel %vm351, %v301, 0
  %v374 = vsel %vm351, %v302, 0
  %376 = vmatpush.msra.mxu0 0.0
  %377 = vmatpush.msra.mxu0 0.0
  %378 = vmatpush.msra.mxu0 0.0
  %379 = vmatpush.msra.mxu0 0.0
  %380 = vmatpush.msra.mxu0 0.0
  %381 = vmatpush.msra.mxu0 0.0
  %382 = vmatpush.msra.mxu0 0.0
  %383 = vmatpush.msra.mxu0 0.0
  %384 = vmatpush.msra.mxu0 %v294
  %385 = vmatpush.msra.mxu0 %v293
  %386 = vmatpush.msra.mxu0 %v292
  %387 = vmatpush.msra.mxu0 %v291
  %388 = vmatpush.msra.mxu0 %v290
  %389 = vmatpush.msra.mxu0 %v289
  %390 = vmatpush.msra.mxu0 %v288
  %391 = vmatpush.msra.mxu0 %v287
  %392 = vmatmul.f32.gmra.mxu0 %v353
  %v393 = vpop.f32.mrf.mxu0
  %v394 = vadd.f32 %v314, %v393
  %395 = vmatmul.f32.gmra.mxu0 %v356
  %v396 = vpop.f32.mrf.mxu0
  %v397 = vadd.f32 %v319, %v396
  %398 = vmatmul.f32.gmra.mxu0 %v359
  %v399 = vpop.f32.mrf.mxu0
  %v400 = vadd.f32 %v324, %v399
  %401 = vmatmul.f32.gmra.mxu0 %v362
  %v402 = vpop.f32.mrf.mxu0
  %v403 = vadd.f32 %v329, %v402
  %404 = vmatmul.f32.gmra.mxu0 %v365
  %v405 = vpop.f32.mrf.mxu0
  %v406 = vadd.f32 %v334, %v405
  %407 = vmatmul.f32.gmra.mxu0 %v368
  %v408 = vpop.f32.mrf.mxu0
  %v409 = vadd.f32 %v339, %v408
  %410 = vmatmul.f32.gmra.mxu0 %v371
  %v411 = vpop.f32.mrf.mxu0
  %v412 = vadd.f32 %v344, %v411
  %413 = vmatmul.f32.gmra.mxu0 %v374
  %v414 = vpop.f32.mrf.mxu0
  %v415 = vadd.f32 %v349, %v414
  %416 = vdwg.mxu0
  %v417 = vtanh.pop %v394
  %v418 = vtanh.pop %v397
  %v419 = vtanh.pop %v400
  %v420 = vtanh.pop %v403
  %v421 = vtanh.pop %v406
  %v422 = vtanh.pop %v409
  %v423 = vtanh.pop %v412
  %v424 = vtanh.pop %v415
  %v425 = vld [vmem:[%s5] sm:$0xf]
  %v426 = vld [vmem:[%s6] sm:$0xf]
  %428 = vset.pattern.permute.xlu0 0
  %429 = vperm.xlu0 %428, %v426
  %v430 = vpop.permute.xlu0 %429
  %v433 = vsel %vm351, %v425, 0
  %435 = vmatpush.msra.mxu0 0.0
  %436 = vmatpush.msra.mxu0 0.0
  %437 = vmatpush.msra.mxu0 0.0
  %438 = vmatpush.msra.mxu0 0.0
  %439 = vmatpush.msra.mxu0 0.0
  %440 = vmatpush.msra.mxu0 0.0
  %441 = vmatpush.msra.mxu0 0.0
  %442 = vmatpush.msra.mxu0 0.0
  %443 = vmatpush.msra.mxu0 %v424
  %444 = vmatpush.msra.mxu0 %v423
  %445 = vmatpush.msra.mxu0 %v422
  %446 = vmatpush.msra.mxu0 %v421
  %447 = vmatpush.msra.mxu0 %v420
  %448 = vmatpush.msra.mxu0 %v419
  %449 = vmatpush.msra.mxu0 %v418
  %450 = vmatpush.msra.mxu0 %v417
  %451 = vmatmul.f32.gmra.mxu0 %v433
  %v452 = vpop.f32.mrf.mxu0
  %v453 = vadd.f32 %v430, %v452
  %454 = vdwg.mxu0
  %v455 = vand.u32 2147483647, %v453
  %v456 = vsub.f32 0.0, %v455
  %v457 = vmul.f32 %v456, 1.442695
  %v458 = vpow.pop %v457
  %v459 = vadd.f32 %v458, 1.0
  %v460 = vlog2.pop %v459
  %v461 = vmul.f32 %v460, 0.6931472
  %v462 = vmul.f32 -0.5, %v458
  %v463 = vadd.f32 %v462, 1.0
  %v464 = vmul.f32 %v463, %v458
  %v465 = vand.u32 2147483647, %v458
  %vm466 = vcmp.lt.f32.partialorder %v465, 0.0004427343
  %v467 = vsel %vm466, %v464, %v461
  %v468 = vmax.f32 %v453, 0.0
  %v469 = vadd.f32 %v467, %v468
  %v470 = vmul.f32 %v469, %v26
  %v472 = vrot.slane %v470, 1
  %v474 = vadd.f32 %v470, %v472
  %v475 = vrot.slane %v470, 2
  %v477 = vadd.f32 %v474, %v475
  %v478 = vrot.slane %v470, 3
  %v480 = vadd.f32 %v477, %v478
  %481 = vst [vmem:[%s7] sm:$0x1] %v480
  // Predicated region
  $region30: #{_pid_net_forward_impl.1} parent=0 // pred_check
    _
  $region31: #{_pid_net_forward_impl.1} parent=0 // pred_check_branch
    %483 = sbr.rel (0) target = $region33
  $region32: #{_pid_net_forward_impl.1} parent=0 // pred_region
    _
  $region33: #{_pid_net_forward_impl.1} parent=0 // pred_fallthru
    _
  // Predicated region
  $region34: #{_pid_net_forward_impl.1} parent=0 // pred_check
    _
  $region35: #{_pid_net_forward_impl.1} parent=0 // pred_check_branch
    %485 = sbr.rel (0) target = $region37
  $region36: #{_pid_net_forward_impl.1} parent=0 // pred_region
    _
  $region37: #{_pid_net_forward_impl.1} parent=0 // pred_fallthru
    _

</llo_original>
